<compile_context>
chip_gen: v6e
topology: v6e:2x2x1
jax: 0.10.0
libtpu: 0.0.40
codegen_flags: <defaults>
</compile_context>

<pallas_src>
import jax
import jax.numpy as jnp
from jax.experimental import pallas as pl
from jax.experimental.pallas import tpu as pltpu


def _round_up(x, m):
    return ((x + m - 1) // m) * m


def _mlp_kernel(mel_ref, sym_ref, w1m_ref, w1s_ref, b1_ref, w2_ref, b2_ref, o_ref):
    # First layer: mel @ W1_mel on the MXU, f32 accumulation.
    h = jnp.dot(mel_ref[...], w1m_ref[...], preferred_element_type=jnp.float32)
    if sym_ref.shape[-1] == 1:
        # symbolic_dim == 1: rank-1 term on the VPU (f32), avoids a K=1 matmul.
        h = h + sym_ref[...].astype(jnp.float32) * w1s_ref[...].astype(jnp.float32)
    else:
        h = h + jnp.dot(sym_ref[...], w1s_ref[...], preferred_element_type=jnp.float32)
    h = jnp.maximum(h + b1_ref[...], 0.0)          # bias + ReLU in f32 (v5e-safe)
    # Dropout(p) is identity at inference.
    h = h.astype(w2_ref.dtype)                     # back to compute dtype for the 2nd MXU dot
    o = jnp.dot(h, w2_ref[...], preferred_element_type=jnp.float32) + b2_ref[...]
    o_ref[...] = o.astype(o_ref.dtype)


def _mlp_kernel_no_sym(mel_ref, w1m_ref, b1_ref, w2_ref, b2_ref, o_ref):
    h = jnp.dot(mel_ref[...], w1m_ref[...], preferred_element_type=jnp.float32)
    h = jnp.maximum(h + b1_ref[...], 0.0)
    h = h.astype(w2_ref.dtype)
    o = jnp.dot(h, w2_ref[...], preferred_element_type=jnp.float32) + b2_ref[...]
    o_ref[...] = o.astype(o_ref.dtype)


def sparse_note_classifier_forward(mel, symbolic, params, *,
                                   compute_dtype=jnp.bfloat16, block_b=512):
    """SparseNoteClassifier.forward.

    mel:      (B, input_dim) f32
    symbolic: (B, symbolic_dim) f32 or None
    params:   (w1, b1, w2, b2), weights pre-transposed:
              w1 (total_input, H), b1 (1, H), w2 (H, O), b2 (1, O)
    """
    w1, b1, w2, b2 = params
    B, F_mel = mel.shape
    S = 0 if symbolic is None else symbolic.shape[1]
    H = w1.shape[1]
    O = w2.shape[1]

    # --- Fuse the concat: split W1 into the mel part and the symbolic part. ---
    w1_mel = w1[:F_mel, :]
    w1_sym = w1[F_mel:, :] if S > 0 else None

    # --- Lane-dense output: pad output columns to a multiple of 128 lanes. ---
    O_pad = _round_up(O, 128)
    if O_pad != O:
        w2p = jnp.pad(w2, ((0, 0), (0, O_pad - O)))
        b2p = jnp.pad(b2, ((0, 0), (0, O_pad - O)))
    else:
        w2p, b2p = w2, b2

    # --- Cast matmul operands to the compute dtype; biases stay f32. ---
    cd = compute_dtype
    mel_c = mel.astype(cd)
    w1m_c = w1_mel.astype(cd)
    w2_c = w2p.astype(cd)
    b1_f = b1.astype(jnp.float32)
    b2_f = b2p.astype(jnp.float32)

    # --- Batch tile: large enough to fill the MXU M-dim / HBM pipeline, clipped to B. ---
    bt = min(block_b, _round_up(B, 8))
    grid = (pl.cdiv(B, bt),)

    def resident(shape):
        return pl.BlockSpec(shape, lambda i: (0, 0))

    itemsize = mel_c.dtype.itemsize
    flops = 2 * B * (F_mel + S) * H + 2 * B * H * O_pad
    bytes_accessed = (mel_c.size * itemsize
                      + (B * S * itemsize if S else 0)
                      + w1m_c.size * itemsize + (S * H * itemsize if S else 0)
                      + w2_c.size * itemsize
                      + b1_f.size * 4 + b2_f.size * 4
                      + B * O_pad * 4)
    cost = pl.CostEstimate(flops=flops, transcendentals=0,
                           bytes_accessed=bytes_accessed)

    compiler_params = pltpu.CompilerParams(dimension_semantics=("parallel",))

    if S > 0:
        sym_c = symbolic.astype(cd)
        w1s_c = w1_sym.astype(cd)
        out_pad = pl.pallas_call(
            _mlp_kernel,
            out_shape=jax.ShapeDtypeStruct((B, O_pad), jnp.float32),
            grid=grid,
            in_specs=[
                pl.BlockSpec((bt, F_mel), lambda i: (i, 0)),   # mel tile
                pl.BlockSpec((bt, S), lambda i: (i, 0)),       # symbolic tile
                resident((F_mel, H)),                          # W1_mel (VMEM-resident)
                resident((S, H)),                              # W1_sym
                resident((1, H)),                              # b1
                resident((H, O_pad)),                          # W2 (padded)
                resident((1, O_pad)),                          # b2 (padded)
            ],
            out_specs=pl.BlockSpec((bt, O_pad), lambda i: (i, 0)),
            compiler_params=compiler_params,
            cost_estimate=cost,
        )(mel_c, sym_c, w1m_c, w1s_c, b1_f, w2_c, b2_f)
    else:
        out_pad = pl.pallas_call(
            _mlp_kernel_no_sym,
            out_shape=jax.ShapeDtypeStruct((B, O_pad), jnp.float32),
            grid=grid,
            in_specs=[
                pl.BlockSpec((bt, F_mel), lambda i: (i, 0)),
                resident((F_mel, H)),
                resident((1, H)),
                resident((H, O_pad)),
                resident((1, O_pad)),
            ],
            out_specs=pl.BlockSpec((bt, O_pad), lambda i: (i, 0)),
            compiler_params=compiler_params,
            cost_estimate=cost,
        )(mel_c, w1m_c, b1_f, w2_c, b2_f)

    return out_pad[:, :O]


def init_params(key, total_input, hidden_dim, output_dim):
    """Deterministic synthetic parameters (PyTorch-Linear-style uniform init)."""
    k1, k2, k3, k4 = jax.random.split(key, 4)
    bound1 = 1.0 / (total_input ** 0.5)
    bound2 = 1.0 / (hidden_dim ** 0.5)
    w1 = jax.random.uniform(k1, (total_input, hidden_dim), jnp.float32, -bound1, bound1)
    b1 = jax.random.uniform(k2, (1, hidden_dim), jnp.float32, -bound1, bound1)
    w2 = jax.random.uniform(k3, (hidden_dim, output_dim), jnp.float32, -bound2, bound2)
    b2 = jax.random.uniform(k4, (1, output_dim), jnp.float32, -bound2, bound2)
    return w1, b1, w2, b2


def reference_forward_f32(mel, symbolic, params):
    """Pure-f32 module semantics (concat -> Linear -> ReLU -> Linear)."""
    w1, b1, w2, b2 = params
    x = jnp.concatenate([mel, symbolic], axis=-1) if symbolic is not None else mel
    h = jnp.maximum(x @ w1 + b1, 0.0)
    return h @ w2 + b2


def reference_forward_quantized(mel, symbolic, params, compute_dtype=jnp.bfloat16):
    """Mirrors the kernel's bf16 numerics (split first dot, f32 accum, bf16 re-cast)."""
    w1, b1, w2, b2 = params
    F = mel.shape[1]
    cd = compute_dtype
    h = jnp.dot(mel.astype(cd), w1[:F].astype(cd), preferred_element_type=jnp.float32)
    if symbolic is not None and w1.shape[0] > F:
        h = h + (symbolic.astype(cd).astype(jnp.float32)
                 * w1[F:].astype(cd).astype(jnp.float32))
    h = jnp.maximum(h + b1, 0.0).astype(cd)
    return jnp.dot(h, w2.astype(cd), preferred_element_type=jnp.float32) + b2


if __name__ == "__main__":
    # Small shapes consistent with the module: window=0, n_mels=32 -> input_dim=32,
    # symbolic_dim=1 -> total_input=33, hidden_dim=32, output_dim=24, batch=8.
    B = 8
    n_mels = 32
    window = 0
    symbolic_dim = 1
    hidden_dim = 32
    output_dim = 24
    input_dim = n_mels * (2 * window + 1)
    total_input = input_dim + symbolic_dim

    key = jax.random.PRNGKey(0)
    k_mel, k_sym, k_params = jax.random.split(key, 3)
    mel = jax.random.normal(k_mel, (B, input_dim), jnp.float32)
    symbolic = jax.random.normal(k_sym, (B, symbolic_dim), jnp.float32)
    params = init_params(k_params, total_input, hidden_dim, output_dim)

    logits = sparse_note_classifier_forward(mel, symbolic, params)
    logits = jax.block_until_ready(logits)
    assert logits.shape == (B, output_dim)

    # Tight check vs a reference that mirrors the kernel's bf16/f32 numerics.
    ref_q = reference_forward_quantized(mel, symbolic, params)
    assert jnp.allclose(logits, ref_q, atol=5e-3, rtol=5e-3), "Pallas vs bf16 reference mismatch"

    # Loose sanity check vs the pure-f32 module semantics (bounds bf16 quantization error).
    ref_f32 = reference_forward_f32(mel, symbolic, params)
    assert jnp.allclose(logits, ref_f32, atol=1e-1, rtol=1e-1), "Pallas vs f32 reference mismatch"

    print("KERNEL_OK")
</pallas_src>

<mosaic_0001>
module attributes {stable_mosaic.version = 11 : i64} {
  func.func @_mlp_kernel(%arg0: i32, %arg1: memref<8x32xbf16, #tpu.memory_space<vmem>>, %arg2: memref<8x1xbf16, #tpu.memory_space<vmem>>, %arg3: memref<32x32xbf16, #tpu.memory_space<vmem>>, %arg4: memref<1x32xbf16, #tpu.memory_space<vmem>>, %arg5: memref<1x32xf32, #tpu.memory_space<vmem>>, %arg6: memref<32x128xbf16, #tpu.memory_space<vmem>>, %arg7: memref<1x128xf32, #tpu.memory_space<vmem>>, %arg8: memref<8x128xf32, #tpu.memory_space<vmem>>) attributes {dimension_semantics = [#tpu.dimension_semantics<parallel>], iteration_bounds = array<i64: 1>, scalar_prefetch = 0 : i64, scratch_operands = 0 : i64, tpu.core_type = #tpu.core_type<tc>, window_params = [{transform_indices = @transform_0, window_bounds = array<i64: 8, 32>}, {transform_indices = @transform_1, window_bounds = array<i64: 8, 1>}, {pipeline_mode = #tpu.pipeline_mode<synchronous>, transform_indices = @transform_2, window_bounds = array<i64: 32, 32>}, {pipeline_mode = #tpu.pipeline_mode<synchronous>, transform_indices = @transform_3, window_bounds = array<i64: 1, 32>}, {pipeline_mode = #tpu.pipeline_mode<synchronous>, transform_indices = @transform_4, window_bounds = array<i64: 1, 32>}, {pipeline_mode = #tpu.pipeline_mode<synchronous>, transform_indices = @transform_5, window_bounds = array<i64: 32, 128>}, {pipeline_mode = #tpu.pipeline_mode<synchronous>, transform_indices = @transform_6, window_bounds = array<i64: 1, 128>}, {transform_indices = @transform_7, window_bounds = array<i64: 8, 128>}]} {
    %c0 = arith.constant 0 : index
    %c0_0 = arith.constant 0 : index
    %0 = vector.load %arg1[%c0, %c0_0] : memref<8x32xbf16, #tpu.memory_space<vmem>>, vector<8x32xbf16>
    %c0_1 = arith.constant 0 : index
    %c0_2 = arith.constant 0 : index
    %1 = vector.load %arg3[%c0_1, %c0_2] : memref<32x32xbf16, #tpu.memory_space<vmem>>, vector<32x32xbf16>
    %cst = arith.constant dense<0.000000e+00> : vector<8x32xf32>
    %2 = tpu.matmul %0, %1, %cst {dimension_numbers = #tpu.dot_dimension_numbers<[1], [0], [0], [1], [0, 0, 1, 1], [], []>} : vector<8x32xbf16>, vector<32x32xbf16>, vector<8x32xf32> -> vector<8x32xf32>
    %c0_3 = arith.constant 0 : index
    %c0_4 = arith.constant 0 : index
    %3 = vector.load %arg2[%c0_3, %c0_4] : memref<8x1xbf16, #tpu.memory_space<vmem>>, vector<8x1xbf16>
    %4 = arith.extf %3 : vector<8x1xbf16> to vector<8x1xf32>
    %c0_5 = arith.constant 0 : index
    %c0_6 = arith.constant 0 : index
    %5 = vector.load %arg4[%c0_5, %c0_6] : memref<1x32xbf16, #tpu.memory_space<vmem>>, vector<1x32xbf16>
    %6 = arith.extf %5 : vector<1x32xbf16> to vector<1x32xf32>
    %7 = vector.broadcast %4 : vector<8x1xf32> to vector<8x32xf32>
    %8 = vector.broadcast %6 : vector<1x32xf32> to vector<8x32xf32>
    %9 = arith.mulf %7, %8 : vector<8x32xf32>
    %10 = arith.addf %2, %9 : vector<8x32xf32>
    %c0_7 = arith.constant 0 : index
    %c0_8 = arith.constant 0 : index
    %11 = vector.load %arg5[%c0_7, %c0_8] : memref<1x32xf32, #tpu.memory_space<vmem>>, vector<1x32xf32>
    %12 = vector.broadcast %11 : vector<1x32xf32> to vector<8x32xf32>
    %13 = arith.addf %10, %12 : vector<8x32xf32>
    %cst_9 = arith.constant 0.000000e+00 : f32
    %14 = vector.broadcast %cst_9 : f32 to vector<8x32xf32>
    %15 = arith.maximumf %13, %14 : vector<8x32xf32>
    %16 = arith.truncf %15 : vector<8x32xf32> to vector<8x32xbf16>
    %c0_10 = arith.constant 0 : index
    %c0_11 = arith.constant 0 : index
    %17 = vector.load %arg6[%c0_10, %c0_11] : memref<32x128xbf16, #tpu.memory_space<vmem>>, vector<32x128xbf16>
    %cst_12 = arith.constant dense<0.000000e+00> : vector<8x128xf32>
    %18 = tpu.matmul %16, %17, %cst_12 {dimension_numbers = #tpu.dot_dimension_numbers<[1], [0], [0], [1], [0, 0, 1, 1], [], []>} : vector<8x32xbf16>, vector<32x128xbf16>, vector<8x128xf32> -> vector<8x128xf32>
    %c0_13 = arith.constant 0 : index
    %c0_14 = arith.constant 0 : index
    %19 = vector.load %arg7[%c0_13, %c0_14] : memref<1x128xf32, #tpu.memory_space<vmem>>, vector<1x128xf32>
    %20 = vector.broadcast %19 : vector<1x128xf32> to vector<8x128xf32>
    %21 = arith.addf %18, %20 : vector<8x128xf32>
    %c0_15 = arith.constant 0 : index
    %c0_16 = arith.constant 0 : index
    %22 = vector.load %arg8[%c0_15, %c0_16] : memref<8x128xf32, #tpu.memory_space<vmem>>, vector<8x128xf32>
    tpu.vector_store %arg8[%c0_15, %c0_16], %21 {strides = array<i32>} : memref<8x128xf32, #tpu.memory_space<vmem>>, vector<8x128xf32>,
    return
  }
  func.func @transform_0(%arg0: i32) -> (i32, i32) {
    %c0_i32 = arith.constant 0 : i32
    %c0_i32_0 = arith.constant 0 : i32
    return %arg0, %c0_i32 : i32, i32
  }
  func.func @transform_1(%arg0: i32) -> (i32, i32) {
    %c0_i32 = arith.constant 0 : i32
    %c0_i32_0 = arith.constant 0 : i32
    return %arg0, %c0_i32 : i32, i32
  }
  func.func @transform_2(%arg0: i32) -> (i32, i32) {
    %c0_i32 = arith.constant 0 : i32
    %c0_i32_0 = arith.constant 0 : i32
    %c0_i32_1 = arith.constant 0 : i32
    return %c0_i32, %c0_i32_0 : i32, i32
  }
  func.func @transform_3(%arg0: i32) -> (i32, i32) {
    %c0_i32 = arith.constant 0 : i32
    %c0_i32_0 = arith.constant 0 : i32
    %c0_i32_1 = arith.constant 0 : i32
    return %c0_i32, %c0_i32_0 : i32, i32
  }
  func.func @transform_4(%arg0: i32) -> (i32, i32) {
    %c0_i32 = arith.constant 0 : i32
    %c0_i32_0 = arith.constant 0 : i32
    %c0_i32_1 = arith.constant 0 : i32
    return %c0_i32, %c0_i32_0 : i32, i32
  }
  func.func @transform_5(%arg0: i32) -> (i32, i32) {
    %c0_i32 = arith.constant 0 : i32
    %c0_i32_0 = arith.constant 0 : i32
    %c0_i32_1 = arith.constant 0 : i32
    return %c0_i32, %c0_i32_0 : i32, i32
  }
  func.func @transform_6(%arg0: i32) -> (i32, i32) {
    %c0_i32 = arith.constant 0 : i32
    %c0_i32_0 = arith.constant 0 : i32
    %c0_i32_1 = arith.constant 0 : i32
    return %c0_i32, %c0_i32_0 : i32, i32
  }
  func.func @transform_7(%arg0: i32) -> (i32, i32) {
    %c0_i32 = arith.constant 0 : i32
    %c0_i32_0 = arith.constant 0 : i32
    return %arg0, %c0_i32 : i32, i32
  }
}

</mosaic_0001>

<llo_original>
// kernel: tpu_custom_call.1
$region0: #{tpu_custom_call.1}
  #allocation0 [shape = 'u32[]', space=smem, size = 0x4, offset = 0x4, fixed_abs, tag = 'smem constant byte address 0x4 - core index']
  #allocation1 [shape = 'u32[144,128]{1,0:T(1,128)}', space=vmem, size = 0x12000, scoped, tag = 'internal scratch']
  %s0 = inlined_call_operand.vmem [shape: bf16[8,32], index: 0, kind: input, shape index: {}]
  %s1 = inlined_call_operand.vmem [shape: bf16[8,1], index: 1, kind: input, shape index: {}]
  %s2 = inlined_call_operand.hbm [shape: bf16[32,32], index: 2, kind: input, shape index: {}]
  %s3 = inlined_call_operand.vmem [shape: bf16[1,32], index: 3, kind: input, shape index: {}]
  %s4 = inlined_call_operand.vmem [shape: f32[1,32], index: 4, kind: input, shape index: {}]
  %s5 = inlined_call_operand.hbm [shape: bf16[32,128], index: 5, kind: input, shape index: {}]
  %s6 = inlined_call_operand.vmem [shape: f32[1,128], index: 6, kind: input, shape index: {}]
  %s7 = inlined_call_operand.hbm [shape: f32[8,128], index: 7, kind: output, shape index: {}]
  %s8 = sld [smem:[#allocation0]]
  $region46: #{tpu_custom_call.1} parent=0
    _
  %s10 = ssub.s32 1, %s8
  %s11 = scalar_select 0, %s10, %s8
  $region1: #{tpu_custom_call.1} parent=0
    #allocation2 [shape = 'u8[8192]{0}', space=vmem, size = 0x2000, scoped, tag = 'input window, operand 2, single buffered']
    #allocation3 [shape = 's32[1]{0}', space=sflag, size = 0x4, scoped, tag = 'scoped memory for tpu_custom_call.1']
    #allocation4 [shape = 's32[1]{0}', space=sflag, size = 0x4, scoped, tag = 'scoped memory for tpu_custom_call.1']
    #allocation5 [shape = 'u8[8192]{0}', space=vmem, size = 0x2000, scoped, tag = 'input window, operand 5, single buffered']
    #allocation6 [shape = 's32[1]{0}', space=sflag, size = 0x4, scoped, tag = 'scoped memory for tpu_custom_call.1']
    #allocation7 [shape = 'u8[4096]{0}', space=vmem, size = 0x1000, scoped, tag = 'output window, operand 0, single buffered']
    %12 = vsyncpa [#allocation3], 0
    %13 = vsyncpa [#allocation6], 0
    %14 = vsyncpa [#allocation4], 0
    // Predicated region
    $region2: #{tpu_custom_call.1} parent=1 // pred_check
      _
    $region3: #{tpu_custom_call.1} parent=1 // pred_check_branch
      %16 = sbr.rel (0) target = $region5
    $region4: #{tpu_custom_call.1} parent=1 // pred_region
      _
    $region5: #{tpu_custom_call.1} parent=1 // pred_fallthru
      _
    // Predicated region
    $region6: #{tpu_custom_call.1} parent=1 // pred_check
      _
    $region7: #{tpu_custom_call.1} parent=1 // pred_check_branch
      %18 = sbr.rel (0) target = $region9
    $region8: #{tpu_custom_call.1} parent=1 // pred_region
      _
    $region9: #{tpu_custom_call.1} parent=1 // pred_fallthru
      _
    // Predicated region
    $region10: #{tpu_custom_call.1} parent=1 // pred_check
      _
    $region11: #{tpu_custom_call.1} parent=1 // pred_check_branch
      %20 = sbr.rel (0) target = $region13
    $region12: #{tpu_custom_call.1} parent=1 // pred_region
      %s22 = ssub.s32 256, 256
      %23 = vsyncadd [#allocation3], %s22
      %s24 = sshll.u32 [#allocation2], 4
      %s25 = int_to_ptr.vmem [resolvable:$true] %s24
      %30 = dma.hbm_to_vmem [thread:$0]  %s2, 256, %s25, [#allocation3], 64, 64, 4
    $region13: #{tpu_custom_call.1} parent=1 // pred_fallthru
      _
    // Predicated region
    $region14: #{tpu_custom_call.1} parent=1 // pred_check
      _
    $region15: #{tpu_custom_call.1} parent=1 // pred_check_branch
      %32 = sbr.rel (0) target = $region17
    $region16: #{tpu_custom_call.1} parent=1 // pred_region
      _
    $region17: #{tpu_custom_call.1} parent=1 // pred_fallthru
      _
    // Predicated region
    $region18: #{tpu_custom_call.1} parent=1 // pred_check
      _
    $region19: #{tpu_custom_call.1} parent=1 // pred_check_branch
      %34 = sbr.rel (0) target = $region21
    $region20: #{tpu_custom_call.1} parent=1 // pred_region
      _
    $region21: #{tpu_custom_call.1} parent=1 // pred_fallthru
      _
    // Predicated region
    $region22: #{tpu_custom_call.1} parent=1 // pred_check
      _
    $region23: #{tpu_custom_call.1} parent=1 // pred_check_branch
      %36 = sbr.rel (0) target = $region25
    $region24: #{tpu_custom_call.1} parent=1 // pred_region
      %s38 = ssub.s32 256, 256
      %39 = vsyncadd [#allocation6], %s38
      %s40 = sshll.u32 [#allocation5], 4
      %s41 = int_to_ptr.vmem [resolvable:$true] %s40
      %46 = dma.hbm_to_vmem [thread:$0]  %s5, 256, %s41, [#allocation6], 64, 64, 4
    $region25: #{tpu_custom_call.1} parent=1 // pred_fallthru
      _
    // Predicated region
    $region26: #{tpu_custom_call.1} parent=1 // pred_check
      _
    $region27: #{tpu_custom_call.1} parent=1 // pred_check_branch
      %48 = sbr.rel (0) target = $region29
    $region28: #{tpu_custom_call.1} parent=1 // pred_region
      _
    $region29: #{tpu_custom_call.1} parent=1 // pred_fallthru
      _
    // Predicated region
    $region30: #{tpu_custom_call.1} parent=1 // pred_check
      _
    $region31: #{tpu_custom_call.1} parent=1 // pred_check_branch
      %50 = sbr.rel (0) target = $region33
    $region32: #{tpu_custom_call.1} parent=1 // pred_region
      %51 = dma.done [#allocation3], 256
    $region33: #{tpu_custom_call.1} parent=1 // pred_fallthru
      _
    // Predicated region
    $region34: #{tpu_custom_call.1} parent=1 // pred_check
      _
    $region35: #{tpu_custom_call.1} parent=1 // pred_check_branch
      %53 = sbr.rel (0) target = $region37
    $region36: #{tpu_custom_call.1} parent=1 // pred_region
      %54 = dma.done [#allocation6], 256
    $region37: #{tpu_custom_call.1} parent=1 // pred_fallthru
      _
    %v56 = vld [vmem:[%s0] sm:$0xf]
    %v57 = vld [vmem:[#allocation2] sm:$0xf]
    %v58 = vld [vmem:[#allocation2 + $0x4] sm:$0xf]
    %v59 = vld [vmem:[#allocation2 + $0x8] sm:$0xf]
    %v60 = vld [vmem:[#allocation2 + $0xc] sm:$0xf]
    %v61 = vld [vmem:[%s1] sm:$0xf]
    %v62 = vunpack.c.l.bf16 %v61
    %v63 = vld [vmem:[%s3] sm:$0x1]
    %v64 = vunpack.c.l.bf16 %v63
    %66 = vset.pattern.permute.xlu0 0
    %67 = vperm.xlu0 %66, %v62
    %v68 = vpop.permute.xlu0 %67
    %v70 = vlaneseq
    %v71 = vshrl.u32 %v70, 7
    %v72 = vsub.s32 0, %v71
    %v73 = vrot.slane %v64, %v72
    %v74 = vmul.f32 %v68, %v73
    %v79 = vunpack.c.l.b16 %v57
    %v80 = vunpack.c.l.b16 %v58
    %v81 = vunpack.c.l.b16 %v59
    %v82 = vunpack.c.l.b16 %v60
    %v83 = vpack.c.b16 %v80, %v79
    %v84 = vpack.c.b16 %v82, %v81
    %vm87 = vcmask 261120
    %v89 = vsel %vm87, %v56, 0
    %91 = vmatprep.subr.bf16.mxu0 0
    %92 = vmatpush1.bf16.msra.mxu0 0
    %93 = vmatprep.subr.bf16.mxu0 0
    %94 = vmatpush1.bf16.msra.mxu0 0
    %95 = vmatprep.subr.bf16.mxu0 0
    %96 = vmatpush1.bf16.msra.mxu0 0
    %97 = vmatprep.subr.bf16.mxu0 0
    %98 = vmatpush1.bf16.msra.mxu0 0
    %99 = vmatprep.subr.bf16.mxu0 0
    %100 = vmatpush1.bf16.msra.mxu0 0
    %101 = vmatprep.subr.bf16.mxu0 0
    %102 = vmatpush1.bf16.msra.mxu0 0
    %103 = vmatprep.subr.bf16.mxu0 0
    %104 = vmatpush1.bf16.msra.mxu0 %v84
    %105 = vmatprep.subr.bf16.mxu0 0
    %106 = vmatpush1.bf16.msra.mxu0 %v83
    %107 = vmatprep.subr.bf16.mxu0 0
    %108 = vmatpush2.bf16.msra.mxu0 0
    %109 = vmatprep.subr.bf16.mxu0 0
    %110 = vmatpush2.bf16.msra.mxu0 0
    %111 = vmatprep.subr.bf16.mxu0 0
    %112 = vmatpush2.bf16.msra.mxu0 0
    %113 = vmatprep.subr.bf16.mxu0 0
    %114 = vmatpush2.bf16.msra.mxu0 0
    %115 = vmatprep.subr.bf16.mxu0 0
    %116 = vmatpush2.bf16.msra.mxu0 0
    %117 = vmatprep.subr.bf16.mxu0 0
    %118 = vmatpush2.bf16.msra.mxu0 0
    %119 = vmatprep.subr.bf16.mxu0 0
    %120 = vmatpush2.bf16.msra.mxu0 0
    %121 = vmatprep.subr.bf16.mxu0 0
    %122 = vmatpush2.bf16.msra.mxu0 0
    %123 = vmatprep.mubr.bf16.mxu0 0
    %124 = vmatmul.mubr.bf16.gmra.mxu0 %v89
    %v125 = vpop.f32.mrf.mxu0
    %v126 = vadd.f32 %v74, %v125
    %v127 = vpop.f32.mrf.mxu0
    %v128 = vpop.f32.mrf.mxu0
    %v129 = vpop.f32.mrf.mxu0
    %130 = vdwg.mxu0
    %v131 = vld [vmem:[%s4] sm:$0x1]
    %v133 = vlaneseq
    %v134 = vshrl.u32 %v133, 7
    %v135 = vsub.s32 0, %v134
    %v136 = vrot.slane %v131, %v135
    %v138 = vadd.f32 %v126, %v136
    %v139 = vmax.f32 %v138, 0.0
    %v140 = vpack.c.bf16 %v139, %v139
    %v141 = vld [vmem:[#allocation5] sm:$0xf]
    %v142 = vld [vmem:[#allocation5 + $0x4] sm:$0xf]
    %v143 = vld [vmem:[#allocation5 + $0x8] sm:$0xf]
    %v144 = vld [vmem:[#allocation5 + $0xc] sm:$0xf]
    %v145 = vld [vmem:[%s6] sm:$0x1]
    %v147 = vlaneseq
    %v148 = vshrl.u32 %v147, 7
    %v149 = vsub.s32 0, %v148
    %v150 = vrot.slane %v145, %v149
    %v156 = vunpack.c.l.b16 %v141
    %v157 = vunpack.c.l.b16 %v142
    %v158 = vunpack.c.l.b16 %v143
    %v159 = vunpack.c.l.b16 %v144
    %v160 = vpack.c.b16 %v157, %v156
    %v161 = vpack.c.b16 %v159, %v158
    %v165 = vsel %vm87, %v140, 0
    %167 = vmatprep.subr.bf16.mxu0 0
    %168 = vmatpush1.bf16.msra.mxu0 0
    %169 = vmatprep.subr.bf16.mxu0 0
    %170 = vmatpush1.bf16.msra.mxu0 0
    %171 = vmatprep.subr.bf16.mxu0 0
    %172 = vmatpush1.bf16.msra.mxu0 0
    %173 = vmatprep.subr.bf16.mxu0 0
    %174 = vmatpush1.bf16.msra.mxu0 0
    %175 = vmatprep.subr.bf16.mxu0 0
    %176 = vmatpush1.bf16.msra.mxu0 0
    %177 = vmatprep.subr.bf16.mxu0 0
    %178 = vmatpush1.bf16.msra.mxu0 0
    %179 = vmatprep.subr.bf16.mxu0 0
    %180 = vmatpush1.bf16.msra.mxu0 %v161
    %181 = vmatprep.subr.bf16.mxu0 0
    %182 = vmatpush1.bf16.msra.mxu0 %v160
    %183 = vmatprep.subr.bf16.mxu0 0
    %184 = vmatpush2.bf16.msra.mxu0 0
    %185 = vmatprep.subr.bf16.mxu0 0
    %186 = vmatpush2.bf16.msra.mxu0 0
    %187 = vmatprep.subr.bf16.mxu0 0
    %188 = vmatpush2.bf16.msra.mxu0 0
    %189 = vmatprep.subr.bf16.mxu0 0
    %190 = vmatpush2.bf16.msra.mxu0 0
    %191 = vmatprep.subr.bf16.mxu0 0
    %192 = vmatpush2.bf16.msra.mxu0 0
    %193 = vmatprep.subr.bf16.mxu0 0
    %194 = vmatpush2.bf16.msra.mxu0 0
    %195 = vmatprep.subr.bf16.mxu0 0
    %196 = vmatpush2.bf16.msra.mxu0 0
    %197 = vmatprep.subr.bf16.mxu0 0
    %198 = vmatpush2.bf16.msra.mxu0 0
    %199 = vmatprep.mubr.bf16.mxu0 0
    %200 = vmatmul.mubr.bf16.gmra.mxu0 %v165
    %v201 = vpop.f32.mrf.mxu0
    %v202 = vadd.f32 %v150, %v201
    %v203 = vpop.f32.mrf.mxu0
    %v204 = vpop.f32.mrf.mxu0
    %v205 = vpop.f32.mrf.mxu0
    %206 = vdwg.mxu0
    %207 = vst [vmem:[#allocation7] sm:$0xff] %v202
    // Predicated region
    $region38: #{tpu_custom_call.1} parent=1 // pred_check
      _
    $region39: #{tpu_custom_call.1} parent=1 // pred_check_branch
      %209 = sbr.rel (0) target = $region41
    $region40: #{tpu_custom_call.1} parent=1 // pred_region
      %s211 = ssub.s32 128, 128
      %212 = vsyncadd [#allocation4], %s211
      %s214 = sshll.u32 [#allocation7], 4
      %s215 = int_to_ptr.vmem [resolvable:$true] %s214
      %217 = dma.vmem_to_hbm [thread:$0]  %s215, 128, %s7, [#allocation4]
    $region41: #{tpu_custom_call.1} parent=1 // pred_fallthru
      _
    // Predicated region
    $region42: #{tpu_custom_call.1} parent=1 // pred_check
      _
    $region43: #{tpu_custom_call.1} parent=1 // pred_check_branch
      %219 = sbr.rel (0) target = $region45
    $region44: #{tpu_custom_call.1} parent=1 // pred_region
      %220 = dma.done [#allocation4], 128
    $region45: #{tpu_custom_call.1} parent=1 // pred_fallthru
      _
    %221 = vsyncpa [#allocation3], 1
    %222 = vsyncpa [#allocation6], 1
    %223 = vsyncpa [#allocation4], 1

</llo_original>
